<compile_context>
chip_gen: v5e
topology: v5e:2x2
jax: 0.10.0
libtpu: 0.0.40
codegen_flags: <defaults>
</compile_context>

<pallas_src>
import functools

import jax
import jax.numpy as jnp
from jax.experimental import pallas as pl
from jax.experimental.pallas import tpu as pltpu


OUT_W = 128  # lane-dense output slab width (>= 6 + 1 + 6*3 + 3*3 = 34)


# -----------------------------------------------------------------------------
# Fused Pallas kernel
# -----------------------------------------------------------------------------
def _leaky_relu(h, slope=0.01):
    return jnp.where(h > 0, h, slope * h)


def _run_mlp(h, refs, n_inner):
    """refs = (w_in, b_in, w1, b1, ..., wn, bn, w_out, b_out) VMEM refs."""
    w_in = refs[0][...]
    b_in = refs[1][...]
    h = _leaky_relu(jnp.dot(h, w_in, preferred_element_type=jnp.float32) + b_in)
    for i in range(n_inner):
        w = refs[2 + 2 * i][...]
        b = refs[3 + 2 * i][...]
        h = h + _leaky_relu(jnp.dot(h, w, preferred_element_type=jnp.float32) + b)
    w_out = refs[-2][...]
    b_out = refs[-1][...]
    return jnp.dot(h, w_out, preferred_element_type=jnp.float32) + b_out


def _fused_kernel(n_a, n_h, x_ref, *refs):
    """Single kernel: stage A (bb||master_feats||others_feats) + fused 4-head MLP."""
    out_ref = refs[-1]
    wrefs = refs[:-1]
    n_stage_a = 4 + 2 * n_a
    a_refs = wrefs[:n_stage_a]
    h_refs = wrefs[n_stage_a:]

    x = x_ref[...]                     # (bt, in_f_pad), lane-dense (mult of 128)

    # stage A: [features | skip_m | skip_o]  (all widths stay in vregs)
    fs = _run_mlp(x, a_refs, n_a)

    # stage B: fused heads [r6_m(6)|t_m(1)|r6_o(18)|t_o(9)|zero-pad] -> 128 lanes.
    # The skip+features adds are already folded into the stem weights.
    out_ref[...] = _run_mlp(fs, h_refs, n_h)


def _round_up(n, m):
    return ((n + m - 1) // m) * m


def fused_cam2cam_call(x_flat, fused):
    """x_flat: (B, in_f_pad) f32 -> (B, OUT_W) head slab via one pallas_call."""
    batch, in_f_pad = x_flat.shape

    # Batch padding / tiling: pad to sublane multiple; grid the batch for
    # large inputs (parallel axis -> sharded across TCs on v7x).
    if batch <= 256:
        bt = _round_up(max(batch, 1), 8)
        b_pad = bt
    else:
        bt = 256                       # 256 x 128 x 4B tiles: safe vs scoped VMEM
        b_pad = _round_up(batch, bt)
    if b_pad != batch:
        x_flat = jnp.pad(x_flat, ((0, b_pad - batch), (0, 0)))

    inputs = [x_flat] + fused["stageA"] + fused["heads"]

    in_specs = [pl.BlockSpec((bt, in_f_pad), lambda i: (i, 0))]
    in_specs += [pl.BlockSpec(a.shape, lambda i: (0, 0)) for a in inputs[1:]]
    out_spec = pl.BlockSpec((bt, OUT_W), lambda i: (i, 0))

    kernel = functools.partial(_fused_kernel, fused["n_a"], fused["n_h"])
    slab = pl.pallas_call(
        kernel,
        grid=(b_pad // bt,),
        in_specs=in_specs,
        out_specs=out_spec,
        out_shape=jax.ShapeDtypeStruct((b_pad, OUT_W), jnp.float32),
        compiler_params=pltpu.CompilerParams(
            dimension_semantics=("parallel",)
        ),
    )(*inputs)
    return slab[:batch]


# -----------------------------------------------------------------------------
# Weight fusion (block packing, done once outside the kernel / outside jit)
# -----------------------------------------------------------------------------
def _block_diag(*mats):
    cols = sum(m.shape[1] for m in mats)
    rows = []
    c0 = 0
    for m in mats:
        r = jnp.zeros((m.shape[0], cols), jnp.float32)
        r = r.at[:, c0:c0 + m.shape[1]].set(m)
        rows.append(r)
        c0 += m.shape[1]
    return jnp.concatenate(rows, axis=0)


def _concat_bias(*bs):
    return jnp.concatenate(bs, axis=1)


def _layer_or_identity(p, k, width):
    """k-th residual layer of MLP p, or an exact identity layer (W=0, b=0)."""
    if k < len(p["inner"]):
        return p["inner"][k]
    return (jnp.zeros((width, width), jnp.float32),
            jnp.zeros((1, width), jnp.float32))


def fuse_params(params, scale_t, in_f_pad):
    """Pack the 7 per-head MLPs into 2 fused (block-structured) MLPs."""
    bb = params["bb"]
    mf, of = params["master_feats"], params["others_feats"]

    in_bb = bb["w_in"].shape[0]
    in_m = mf["w_in"].shape[0]
    in_o = of["w_in"].shape[0]
    assert in_bb == in_m + in_o          # x.reshape(B,-1) = [x[:,0] | x[:,1:]]
    assert in_f_pad >= in_bb
    bb_nf = bb["w_in"].shape[1]
    nf = mf["w_in"].shape[1]
    assert of["w_in"].shape[1] == nf
    assert bb["w_out"].shape[1] == nf

    # ---- stage A: bb || master_feats || others_feats ------------------------
    width_a = bb_nf + 2 * nf
    w_in = jnp.zeros((in_f_pad, width_a), jnp.float32)
    w_in = w_in.at[:in_bb, :bb_nf].set(bb["w_in"])                 # bb sees full x
    w_in = w_in.at[:in_m, bb_nf:bb_nf + nf].set(mf["w_in"])        # master: x[:,0]
    w_in = w_in.at[in_m:in_m + in_o, bb_nf + nf:].set(of["w_in"])  # others: x[:,1:]
    b_in = _concat_bias(bb["b_in"], mf["b_in"], of["b_in"])

    depth_a = max(len(bb["inner"]), len(mf["inner"]), len(of["inner"]))
    stage_a = [w_in, b_in]
    for k in range(depth_a):
        wb, bbias = _layer_or_identity(bb, k, bb_nf)
        wm, bm = _layer_or_identity(mf, k, nf)
        wo, bo = _layer_or_identity(of, k, nf)
        stage_a += [_block_diag(wb, wm, wo), _concat_bias(bbias, bm, bo)]
    stage_a += [_block_diag(bb["w_out"], mf["w_out"], of["w_out"]),
                _concat_bias(bb["b_out"], mf["b_out"], of["b_out"])]
    # stage A output layout: [features(nf) | skip_m(nf) | skip_o(nf)]

    # ---- stage B: heads (master_R | master_t | others_R | others_t) --------
    mR, mt = params["master_R"], params["master_t"]
    oR, ot = params["others_R"], params["others_t"]
    heads_list = [mR, mt, oR, ot]
    depth_h = len(mR["inner"])
    assert all(len(h["inner"]) == depth_h for h in heads_list)

    # Original heads stem acts on [feats_m | feats_o]; since
    # feats_m = features + skip_m, feats_o = features + skip_o, fold the adds
    # into the stem so it acts directly on [features | skip_m | skip_o].
    w_m = jnp.concatenate([mR["w_in"], mt["w_in"]], axis=1)   # (nf, 2*nf)
    w_o = jnp.concatenate([oR["w_in"], ot["w_in"]], axis=1)   # (nf, 2*nf)
    zm = jnp.zeros_like(w_m)
    zo = jnp.zeros_like(w_o)
    w_in_h = jnp.concatenate(
        [jnp.concatenate([w_m, w_o], axis=1),   # features -> both master & others
         jnp.concatenate([w_m, zo], axis=1),    # skip_m   -> master heads only
         jnp.concatenate([zm, w_o], axis=1)],   # skip_o   -> others heads only
        axis=0)                                 # (3*nf, 4*nf)
    b_in_h = _concat_bias(mR["b_in"], mt["b_in"], oR["b_in"], ot["b_in"])
    heads = [w_in_h, b_in_h]
    for li in range(depth_h):
        heads += [_block_diag(*(h["inner"][li][0] for h in heads_list)),
                  _concat_bias(*(h["inner"][li][1] for h in heads_list))]

    # output: fold scale_t into translation heads; pad columns to OUT_W lanes
    w_out = _block_diag(mR["w_out"], scale_t * mt["w_out"],
                        oR["w_out"], scale_t * ot["w_out"])
    b_out = _concat_bias(mR["b_out"], scale_t * mt["b_out"],
                         oR["b_out"], scale_t * ot["b_out"])
    n_out = w_out.shape[1]
    assert n_out <= OUT_W
    w_out = jnp.pad(w_out, ((0, 0), (0, OUT_W - n_out)))
    b_out = jnp.pad(b_out, ((0, 0), (0, OUT_W - n_out)))
    heads += [w_out, b_out]

    return {
        "stageA": stage_a,
        "heads": heads,
        "n_a": depth_a,
        "n_h": depth_h,
        "in_f_pad": in_f_pad,
    }


# -----------------------------------------------------------------------------
# Plain-JAX glue: 6D rotation param -> rotation matrix, RotoTransCombiner
# -----------------------------------------------------------------------------
def rot6d_to_matrix(x, eps=1e-8):
    """x: (N, 6) -> (N, 3, 3) via Gram-Schmidt (Zhou et al. 6D repr)."""
    a1, a2 = x[:, :3], x[:, 3:]
    b1 = a1 / jnp.maximum(jnp.linalg.norm(a1, axis=-1, keepdims=True), eps)
    a2p = a2 - jnp.sum(b1 * a2, axis=-1, keepdims=True) * b1
    b2 = a2p / jnp.maximum(jnp.linalg.norm(a2p, axis=-1, keepdims=True), eps)
    b3 = jnp.cross(b1, b2)
    return jnp.stack([b1, b2, b3], axis=-2)


def roto_trans_combine(rotations, translations):
    """rotations (B,V,3,3), translations (B,V,K,1) with K in {1,3} -> (B,V,4,4)."""
    batch, n_views = rotations.shape[:2]
    if translations.shape[-2] == 1:
        trans = jnp.concatenate(
            [jnp.zeros((batch, n_views, 2, 1), jnp.float32), translations], axis=-2
        )
    else:
        trans = translations
    top = jnp.concatenate([rotations, trans], axis=-1)           # (B,V,3,4)
    bottom = jnp.broadcast_to(
        jnp.array([0.0, 0.0, 0.0, 1.0], jnp.float32), (batch, n_views, 1, 4)
    )
    return jnp.concatenate([top, bottom], axis=-2)               # (B,V,4,4)


# -----------------------------------------------------------------------------
# Parameter construction (deterministic, in-script)
# -----------------------------------------------------------------------------
def make_mlp_params(key, in_f, inner, n_inner, out_f, scale=0.1):
    keys = jax.random.split(key, 2 * (n_inner + 2))
    p = {
        "w_in": scale * jax.random.normal(keys[0], (in_f, inner), jnp.float32),
        "b_in": scale * jax.random.normal(keys[1], (1, inner), jnp.float32),
        "inner": [],
        "w_out": scale * jax.random.normal(keys[2], (inner, out_f), jnp.float32),
        "b_out": scale * jax.random.normal(keys[3], (1, out_f), jnp.float32),
    }
    for i in range(n_inner):
        kw, kb = keys[4 + 2 * i], keys[5 + 2 * i]
        p["inner"].append(
            (
                scale * jax.random.normal(kw, (inner, inner), jnp.float32),
                scale * jax.random.normal(kb, (1, inner), jnp.float32),
            )
        )
    return p


def make_cam2cam_params(key, n_views, n_joints, bb_nf, bb_layers, master_nf):
    ks = jax.random.split(key, 7)
    n_others = n_views - 1
    return {
        "bb": make_mlp_params(ks[0], n_views * n_joints * 2, bb_nf, bb_layers, master_nf),
        "master_feats": make_mlp_params(ks[1], 1 * n_joints * 2, master_nf, 3, master_nf),
        "master_R": make_mlp_params(ks[2], master_nf, master_nf, 2, 1 * 6),
        "master_t": make_mlp_params(ks[3], master_nf, master_nf, 2, 1),          # DepthBlock
        "others_feats": make_mlp_params(ks[4], n_others * n_joints * 2, master_nf, 3, master_nf),
        "others_R": make_mlp_params(ks[5], master_nf, master_nf, 2, n_others * 6),
        "others_t": make_mlp_params(ks[6], master_nf, master_nf, 2, n_others * 3),
    }


# -----------------------------------------------------------------------------
# Cam2camNet forward (fused kernel + tiny glue)
# -----------------------------------------------------------------------------
def cam2cam_forward(x, fused):
    """x: (B, n_views, n_joints, 2) -> (B, n_views, 4, 4)."""
    batch, n_views, n_joints, _ = x.shape
    n_others = n_views - 1

    x_flat = x.reshape(batch, n_views * n_joints * 2).astype(jnp.float32)
    in_f_pad = fused["in_f_pad"]
    if in_f_pad != x_flat.shape[1]:
        x_flat = jnp.pad(x_flat, ((0, 0), (0, in_f_pad - x_flat.shape[1])))

    slab = fused_cam2cam_call(x_flat, fused)                 # (B, OUT_W)

    # slice the lane-dense head slab: [r6_m(6) | t_m(1) | r6_o(6*no) | t_o(3*no)]
    r6_m = slab[:, 0:6]
    t_m = slab[:, 6:7].reshape(batch, 1, 1, 1)
    off = 7
    r6_o = slab[:, off:off + 6 * n_others]
    off += 6 * n_others
    t_o = slab[:, off:off + 3 * n_others].reshape(batch, n_others, 3, 1)

    R_m = rot6d_to_matrix(r6_m.reshape(-1, 6)).reshape(batch, 1, 3, 3)
    R_o = rot6d_to_matrix(r6_o.reshape(-1, 6)).reshape(batch, n_others, 3, 3)

    masters = roto_trans_combine(R_m, t_m)                   # (B, 1, 4, 4)
    others = roto_trans_combine(R_o, t_o)                    # (B, n_others, 4, 4)
    return jnp.concatenate([masters, others], axis=1)        # (B, n_views, 4, 4)


# -----------------------------------------------------------------------------
# Pure-JAX reference (unfused) for correctness check
# -----------------------------------------------------------------------------
def _ref_mlp(x, p):
    h = _leaky_relu(x @ p["w_in"] + p["b_in"])
    for w, b in p["inner"]:
        h = h + _leaky_relu(h @ w + b)
    return h @ p["w_out"] + p["b_out"]


def reference_forward(x, params, scale_t):
    batch, n_views, n_joints, _ = x.shape
    n_others = n_views - 1
    xf = x.reshape(batch, -1)
    features = _ref_mlp(xf, params["bb"])
    feats_m = _ref_mlp(x[:, 0].reshape(batch, -1), params["master_feats"]) + features
    feats_o = _ref_mlp(x[:, 1:].reshape(batch, -1), params["others_feats"]) + features
    r6_m = _ref_mlp(feats_m, params["master_R"])
    t_m = (_ref_mlp(feats_m, params["master_t"]) * scale_t).reshape(batch, 1, 1, 1)
    r6_o = _ref_mlp(feats_o, params["others_R"])
    t_o = (_ref_mlp(feats_o, params["others_t"]) * scale_t).reshape(batch, n_others, 3, 1)
    R_m = rot6d_to_matrix(r6_m.reshape(-1, 6)).reshape(batch, 1, 3, 3)
    R_o = rot6d_to_matrix(r6_o.reshape(-1, 6)).reshape(batch, n_others, 3, 3)
    return jnp.concatenate(
        [roto_trans_combine(R_m, t_m), roto_trans_combine(R_o, t_o)], axis=1
    )


# -----------------------------------------------------------------------------
# Main
# -----------------------------------------------------------------------------
if __name__ == "__main__":
    BATCH = 2
    N_VIEWS = 4
    N_JOINTS = 8
    BB_NF = 32
    BB_LAYERS = 2
    MASTER_NF = 32
    SCALE_T = 1.0

    key = jax.random.PRNGKey(0)
    k_x, k_p = jax.random.split(key)

    x = jax.random.normal(k_x, (BATCH, N_VIEWS, N_JOINTS, 2), jnp.float32)
    params = make_cam2cam_params(k_p, N_VIEWS, N_JOINTS, BB_NF, BB_LAYERS, MASTER_NF)

    # pack / fuse weights ONCE, outside the jitted forward
    in_f = N_VIEWS * N_JOINTS * 2
    in_f_pad = _round_up(in_f, 128)
    fused = jax.tree_util.tree_map(
        lambda a: a, fuse_params(params, SCALE_T, in_f_pad)
    )

    fwd = jax.jit(lambda inp: cam2cam_forward(inp, fused))
    out = jax.block_until_ready(fwd(x))

    assert out.shape == (BATCH, N_VIEWS, 4, 4), out.shape
    assert out.dtype == jnp.float32
    assert bool(jnp.all(jnp.isfinite(out)))

    # correctness of the fused (block-structured) kernel vs unfused reference
    ref = reference_forward(x, params, SCALE_T)
    max_err = float(jnp.max(jnp.abs(out - ref)))
    assert max_err < 5e-2, f"fused kernel mismatch: {max_err}"

    print("KERNEL_OK")
</pallas_src>

<mosaic_0001>
module attributes {stable_mosaic.version = 11 : i64} {
  func.func @_fused_kernel(%arg0: i32, %arg1: memref<8x128xf32, #tpu.memory_space<vmem>>, %arg2: memref<128x96xf32, #tpu.memory_space<vmem>>, %arg3: memref<1x96xf32, #tpu.memory_space<vmem>>, %arg4: memref<96x96xf32, #tpu.memory_space<vmem>>, %arg5: memref<1x96xf32, #tpu.memory_space<vmem>>, %arg6: memref<96x96xf32, #tpu.memory_space<vmem>>, %arg7: memref<1x96xf32, #tpu.memory_space<vmem>>, %arg8: memref<96x96xf32, #tpu.memory_space<vmem>>, %arg9: memref<1x96xf32, #tpu.memory_space<vmem>>, %arg10: memref<96x96xf32, #tpu.memory_space<vmem>>, %arg11: memref<1x96xf32, #tpu.memory_space<vmem>>, %arg12: memref<96x128xf32, #tpu.memory_space<vmem>>, %arg13: memref<1x128xf32, #tpu.memory_space<vmem>>, %arg14: memref<128x128xf32, #tpu.memory_space<vmem>>, %arg15: memref<1x128xf32, #tpu.memory_space<vmem>>, %arg16: memref<128x128xf32, #tpu.memory_space<vmem>>, %arg17: memref<1x128xf32, #tpu.memory_space<vmem>>, %arg18: memref<128x128xf32, #tpu.memory_space<vmem>>, %arg19: memref<1x128xf32, #tpu.memory_space<vmem>>, %arg20: memref<8x128xf32, #tpu.memory_space<vmem>>) attributes {dimension_semantics = [#tpu.dimension_semantics<parallel>], iteration_bounds = array<i64: 1>, scalar_prefetch = 0 : i64, scratch_operands = 0 : i64, tpu.core_type = #tpu.core_type<tc>, window_params = [{transform_indices = @transform_0, window_bounds = array<i64: 8, 128>}, {pipeline_mode = #tpu.pipeline_mode<synchronous>, transform_indices = @transform_1, window_bounds = array<i64: 128, 96>}, {pipeline_mode = #tpu.pipeline_mode<synchronous>, transform_indices = @transform_2, window_bounds = array<i64: 1, 96>}, {pipeline_mode = #tpu.pipeline_mode<synchronous>, transform_indices = @transform_3, window_bounds = array<i64: 96, 96>}, {pipeline_mode = #tpu.pipeline_mode<synchronous>, transform_indices = @transform_4, window_bounds = array<i64: 1, 96>}, {pipeline_mode = #tpu.pipeline_mode<synchronous>, transform_indices = @transform_5, window_bounds = array<i64: 96, 96>}, {pipeline_mode = #tpu.pipeline_mode<synchronous>, transform_indices = @transform_6, window_bounds = array<i64: 1, 96>}, {pipeline_mode = #tpu.pipeline_mode<synchronous>, transform_indices = @transform_7, window_bounds = array<i64: 96, 96>}, {pipeline_mode = #tpu.pipeline_mode<synchronous>, transform_indices = @transform_8, window_bounds = array<i64: 1, 96>}, {pipeline_mode = #tpu.pipeline_mode<synchronous>, transform_indices = @transform_9, window_bounds = array<i64: 96, 96>}, {pipeline_mode = #tpu.pipeline_mode<synchronous>, transform_indices = @transform_10, window_bounds = array<i64: 1, 96>}, {pipeline_mode = #tpu.pipeline_mode<synchronous>, transform_indices = @transform_11, window_bounds = array<i64: 96, 128>}, {pipeline_mode = #tpu.pipeline_mode<synchronous>, transform_indices = @transform_12, window_bounds = array<i64: 1, 128>}, {pipeline_mode = #tpu.pipeline_mode<synchronous>, transform_indices = @transform_13, window_bounds = array<i64: 128, 128>}, {pipeline_mode = #tpu.pipeline_mode<synchronous>, transform_indices = @transform_14, window_bounds = array<i64: 1, 128>}, {pipeline_mode = #tpu.pipeline_mode<synchronous>, transform_indices = @transform_15, window_bounds = array<i64: 128, 128>}, {pipeline_mode = #tpu.pipeline_mode<synchronous>, transform_indices = @transform_16, window_bounds = array<i64: 1, 128>}, {pipeline_mode = #tpu.pipeline_mode<synchronous>, transform_indices = @transform_17, window_bounds = array<i64: 128, 128>}, {pipeline_mode = #tpu.pipeline_mode<synchronous>, transform_indices = @transform_18, window_bounds = array<i64: 1, 128>}, {transform_indices = @transform_19, window_bounds = array<i64: 8, 128>}]} {
    %c0 = arith.constant 0 : index
    %c0_0 = arith.constant 0 : index
    %0 = vector.load %arg1[%c0, %c0_0] : memref<8x128xf32, #tpu.memory_space<vmem>>, vector<8x128xf32>
    %c0_1 = arith.constant 0 : index
    %c0_2 = arith.constant 0 : index
    %1 = vector.load %arg2[%c0_1, %c0_2] : memref<128x96xf32, #tpu.memory_space<vmem>>, vector<128x96xf32>
    %c0_3 = arith.constant 0 : index
    %c0_4 = arith.constant 0 : index
    %2 = vector.load %arg3[%c0_3, %c0_4] : memref<1x96xf32, #tpu.memory_space<vmem>>, vector<1x96xf32>
    %cst = arith.constant dense<0.000000e+00> : vector<8x96xf32>
    %3 = tpu.matmul %0, %1, %cst {dimension_numbers = #tpu.dot_dimension_numbers<[1], [0], [0], [1], [0, 0, 1, 1], [], []>} : vector<8x128xf32>, vector<128x96xf32>, vector<8x96xf32> -> vector<8x96xf32>
    %4 = vector.broadcast %2 : vector<1x96xf32> to vector<8x96xf32>
    %5 = arith.addf %3, %4 : vector<8x96xf32>
    %cst_5 = arith.constant 0.000000e+00 : f32
    %6 = vector.broadcast %cst_5 : f32 to vector<8x96xf32>
    %7 = arith.cmpf ogt, %5, %6 : vector<8x96xf32>
    %cst_6 = arith.constant 0.00999999977 : f32
    %8 = vector.broadcast %cst_6 : f32 to vector<8x96xf32>
    %9 = arith.mulf %8, %5 : vector<8x96xf32>
    %10 = arith.select %7, %5, %9 : vector<8x96xi1>, vector<8x96xf32>
    %c0_7 = arith.constant 0 : index
    %c0_8 = arith.constant 0 : index
    %11 = vector.load %arg4[%c0_7, %c0_8] : memref<96x96xf32, #tpu.memory_space<vmem>>, vector<96x96xf32>
    %c0_9 = arith.constant 0 : index
    %c0_10 = arith.constant 0 : index
    %12 = vector.load %arg5[%c0_9, %c0_10] : memref<1x96xf32, #tpu.memory_space<vmem>>, vector<1x96xf32>
    %cst_11 = arith.constant dense<0.000000e+00> : vector<8x96xf32>
    %13 = tpu.matmul %10, %11, %cst_11 {dimension_numbers = #tpu.dot_dimension_numbers<[1], [0], [0], [1], [0, 0, 1, 1], [], []>} : vector<8x96xf32>, vector<96x96xf32>, vector<8x96xf32> -> vector<8x96xf32>
    %14 = vector.broadcast %12 : vector<1x96xf32> to vector<8x96xf32>
    %15 = arith.addf %13, %14 : vector<8x96xf32>
    %cst_12 = arith.constant 0.000000e+00 : f32
    %16 = vector.broadcast %cst_12 : f32 to vector<8x96xf32>
    %17 = arith.cmpf ogt, %15, %16 : vector<8x96xf32>
    %cst_13 = arith.constant 0.00999999977 : f32
    %18 = vector.broadcast %cst_13 : f32 to vector<8x96xf32>
    %19 = arith.mulf %18, %15 : vector<8x96xf32>
    %20 = arith.select %17, %15, %19 : vector<8x96xi1>, vector<8x96xf32>
    %21 = arith.addf %10, %20 : vector<8x96xf32>
    %c0_14 = arith.constant 0 : index
    %c0_15 = arith.constant 0 : index
    %22 = vector.load %arg6[%c0_14, %c0_15] : memref<96x96xf32, #tpu.memory_space<vmem>>, vector<96x96xf32>
    %c0_16 = arith.constant 0 : index
    %c0_17 = arith.constant 0 : index
    %23 = vector.load %arg7[%c0_16, %c0_17] : memref<1x96xf32, #tpu.memory_space<vmem>>, vector<1x96xf32>
    %cst_18 = arith.constant dense<0.000000e+00> : vector<8x96xf32>
    %24 = tpu.matmul %21, %22, %cst_18 {dimension_numbers = #tpu.dot_dimension_numbers<[1], [0], [0], [1], [0, 0, 1, 1], [], []>} : vector<8x96xf32>, vector<96x96xf32>, vector<8x96xf32> -> vector<8x96xf32>
    %25 = vector.broadcast %23 : vector<1x96xf32> to vector<8x96xf32>
    %26 = arith.addf %24, %25 : vector<8x96xf32>
    %cst_19 = arith.constant 0.000000e+00 : f32
    %27 = vector.broadcast %cst_19 : f32 to vector<8x96xf32>
    %28 = arith.cmpf ogt, %26, %27 : vector<8x96xf32>
    %cst_20 = arith.constant 0.00999999977 : f32
    %29 = vector.broadcast %cst_20 : f32 to vector<8x96xf32>
    %30 = arith.mulf %29, %26 : vector<8x96xf32>
    %31 = arith.select %28, %26, %30 : vector<8x96xi1>, vector<8x96xf32>
    %32 = arith.addf %21, %31 : vector<8x96xf32>
    %c0_21 = arith.constant 0 : index
    %c0_22 = arith.constant 0 : index
    %33 = vector.load %arg8[%c0_21, %c0_22] : memref<96x96xf32, #tpu.memory_space<vmem>>, vector<96x96xf32>
    %c0_23 = arith.constant 0 : index
    %c0_24 = arith.constant 0 : index
    %34 = vector.load %arg9[%c0_23, %c0_24] : memref<1x96xf32, #tpu.memory_space<vmem>>, vector<1x96xf32>
    %cst_25 = arith.constant dense<0.000000e+00> : vector<8x96xf32>
    %35 = tpu.matmul %32, %33, %cst_25 {dimension_numbers = #tpu.dot_dimension_numbers<[1], [0], [0], [1], [0, 0, 1, 1], [], []>} : vector<8x96xf32>, vector<96x96xf32>, vector<8x96xf32> -> vector<8x96xf32>
    %36 = vector.broadcast %34 : vector<1x96xf32> to vector<8x96xf32>
    %37 = arith.addf %35, %36 : vector<8x96xf32>
    %cst_26 = arith.constant 0.000000e+00 : f32
    %38 = vector.broadcast %cst_26 : f32 to vector<8x96xf32>
    %39 = arith.cmpf ogt, %37, %38 : vector<8x96xf32>
    %cst_27 = arith.constant 0.00999999977 : f32
    %40 = vector.broadcast %cst_27 : f32 to vector<8x96xf32>
    %41 = arith.mulf %40, %37 : vector<8x96xf32>
    %42 = arith.select %39, %37, %41 : vector<8x96xi1>, vector<8x96xf32>
    %43 = arith.addf %32, %42 : vector<8x96xf32>
    %c0_28 = arith.constant 0 : index
    %c0_29 = arith.constant 0 : index
    %44 = vector.load %arg10[%c0_28, %c0_29] : memref<96x96xf32, #tpu.memory_space<vmem>>, vector<96x96xf32>
    %c0_30 = arith.constant 0 : index
    %c0_31 = arith.constant 0 : index
    %45 = vector.load %arg11[%c0_30, %c0_31] : memref<1x96xf32, #tpu.memory_space<vmem>>, vector<1x96xf32>
    %cst_32 = arith.constant dense<0.000000e+00> : vector<8x96xf32>
    %46 = tpu.matmul %43, %44, %cst_32 {dimension_numbers = #tpu.dot_dimension_numbers<[1], [0], [0], [1], [0, 0, 1, 1], [], []>} : vector<8x96xf32>, vector<96x96xf32>, vector<8x96xf32> -> vector<8x96xf32>
    %47 = vector.broadcast %45 : vector<1x96xf32> to vector<8x96xf32>
    %48 = arith.addf %46, %47 : vector<8x96xf32>
    %c0_33 = arith.constant 0 : index
    %c0_34 = arith.constant 0 : index
    %49 = vector.load %arg12[%c0_33, %c0_34] : memref<96x128xf32, #tpu.memory_space<vmem>>, vector<96x128xf32>
    %c0_35 = arith.constant 0 : index
    %c0_36 = arith.constant 0 : index
    %50 = vector.load %arg13[%c0_35, %c0_36] : memref<1x128xf32, #tpu.memory_space<vmem>>, vector<1x128xf32>
    %cst_37 = arith.constant dense<0.000000e+00> : vector<8x128xf32>
    %51 = tpu.matmul %48, %49, %cst_37 {dimension_numbers = #tpu.dot_dimension_numbers<[1], [0], [0], [1], [0, 0, 1, 1], [], []>} : vector<8x96xf32>, vector<96x128xf32>, vector<8x128xf32> -> vector<8x128xf32>
    %52 = vector.broadcast %50 : vector<1x128xf32> to vector<8x128xf32>
    %53 = arith.addf %51, %52 : vector<8x128xf32>
    %cst_38 = arith.constant 0.000000e+00 : f32
    %54 = vector.broadcast %cst_38 : f32 to vector<8x128xf32>
    %55 = arith.cmpf ogt, %53, %54 : vector<8x128xf32>
    %cst_39 = arith.constant 0.00999999977 : f32
    %56 = vector.broadcast %cst_39 : f32 to vector<8x128xf32>
    %57 = arith.mulf %56, %53 : vector<8x128xf32>
    %58 = arith.select %55, %53, %57 : vector<8x128xi1>, vector<8x128xf32>
    %c0_40 = arith.constant 0 : index
    %c0_41 = arith.constant 0 : index
    %59 = vector.load %arg14[%c0_40, %c0_41] : memref<128x128xf32, #tpu.memory_space<vmem>>, vector<128x128xf32>
    %c0_42 = arith.constant 0 : index
    %c0_43 = arith.constant 0 : index
    %60 = vector.load %arg15[%c0_42, %c0_43] : memref<1x128xf32, #tpu.memory_space<vmem>>, vector<1x128xf32>
    %cst_44 = arith.constant dense<0.000000e+00> : vector<8x128xf32>
    %61 = tpu.matmul %58, %59, %cst_44 {dimension_numbers = #tpu.dot_dimension_numbers<[1], [0], [0], [1], [0, 0, 1, 1], [], []>} : vector<8x128xf32>, vector<128x128xf32>, vector<8x128xf32> -> vector<8x128xf32>
    %62 = vector.broadcast %60 : vector<1x128xf32> to vector<8x128xf32>
    %63 = arith.addf %61, %62 : vector<8x128xf32>
    %cst_45 = arith.constant 0.000000e+00 : f32
    %64 = vector.broadcast %cst_45 : f32 to vector<8x128xf32>
    %65 = arith.cmpf ogt, %63, %64 : vector<8x128xf32>
    %cst_46 = arith.constant 0.00999999977 : f32
    %66 = vector.broadcast %cst_46 : f32 to vector<8x128xf32>
    %67 = arith.mulf %66, %63 : vector<8x128xf32>
    %68 = arith.select %65, %63, %67 : vector<8x128xi1>, vector<8x128xf32>
    %69 = arith.addf %58, %68 : vector<8x128xf32>
    %c0_47 = arith.constant 0 : index
    %c0_48 = arith.constant 0 : index
    %70 = vector.load %arg16[%c0_47, %c0_48] : memref<128x128xf32, #tpu.memory_space<vmem>>, vector<128x128xf32>
    %c0_49 = arith.constant 0 : index
    %c0_50 = arith.constant 0 : index
    %71 = vector.load %arg17[%c0_49, %c0_50] : memref<1x128xf32, #tpu.memory_space<vmem>>, vector<1x128xf32>
    %cst_51 = arith.constant dense<0.000000e+00> : vector<8x128xf32>
    %72 = tpu.matmul %69, %70, %cst_51 {dimension_numbers = #tpu.dot_dimension_numbers<[1], [0], [0], [1], [0, 0, 1, 1], [], []>} : vector<8x128xf32>, vector<128x128xf32>, vector<8x128xf32> -> vector<8x128xf32>
    %73 = vector.broadcast %71 : vector<1x128xf32> to vector<8x128xf32>
    %74 = arith.addf %72, %73 : vector<8x128xf32>
    %cst_52 = arith.constant 0.000000e+00 : f32
    %75 = vector.broadcast %cst_52 : f32 to vector<8x128xf32>
    %76 = arith.cmpf ogt, %74, %75 : vector<8x128xf32>
    %cst_53 = arith.constant 0.00999999977 : f32
    %77 = vector.broadcast %cst_53 : f32 to vector<8x128xf32>
    %78 = arith.mulf %77, %74 : vector<8x128xf32>
    %79 = arith.select %76, %74, %78 : vector<8x128xi1>, vector<8x128xf32>
    %80 = arith.addf %69, %79 : vector<8x128xf32>
    %c0_54 = arith.constant 0 : index
    %c0_55 = arith.constant 0 : index
    %81 = vector.load %arg18[%c0_54, %c0_55] : memref<128x128xf32, #tpu.memory_space<vmem>>, vector<128x128xf32>
    %c0_56 = arith.constant 0 : index
    %c0_57 = arith.constant 0 : index
    %82 = vector.load %arg19[%c0_56, %c0_57] : memref<1x128xf32, #tpu.memory_space<vmem>>, vector<1x128xf32>
    %cst_58 = arith.constant dense<0.000000e+00> : vector<8x128xf32>
    %83 = tpu.matmul %80, %81, %cst_58 {dimension_numbers = #tpu.dot_dimension_numbers<[1], [0], [0], [1], [0, 0, 1, 1], [], []>} : vector<8x128xf32>, vector<128x128xf32>, vector<8x128xf32> -> vector<8x128xf32>
    %84 = vector.broadcast %82 : vector<1x128xf32> to vector<8x128xf32>
    %85 = arith.addf %83, %84 : vector<8x128xf32>
    %c0_59 = arith.constant 0 : index
    %c0_60 = arith.constant 0 : index
    %86 = vector.load %arg20[%c0_59, %c0_60] : memref<8x128xf32, #tpu.memory_space<vmem>>, vector<8x128xf32>
    tpu.vector_store %arg20[%c0_59, %c0_60], %85 {strides = array<i32>} : memref<8x128xf32, #tpu.memory_space<vmem>>, vector<8x128xf32>,
    return
  }
  func.func @transform_0(%arg0: i32) -> (i32, i32) {
    %c0_i32 = arith.constant 0 : i32
    %c0_i32_0 = arith.constant 0 : i32
    return %arg0, %c0_i32 : i32, i32
  }
  func.func @transform_1(%arg0: i32) -> (i32, i32) {
    %c0_i32 = arith.constant 0 : i32
    %c0_i32_0 = arith.constant 0 : i32
    %c0_i32_1 = arith.constant 0 : i32
    return %c0_i32, %c0_i32_0 : i32, i32
  }
  func.func @transform_2(%arg0: i32) -> (i32, i32) {
    %c0_i32 = arith.constant 0 : i32
    %c0_i32_0 = arith.constant 0 : i32
    %c0_i32_1 = arith.constant 0 : i32
    return %c0_i32, %c0_i32_0 : i32, i32
  }
  func.func @transform_3(%arg0: i32) -> (i32, i32) {
    %c0_i32 = arith.constant 0 : i32
    %c0_i32_0 = arith.constant 0 : i32
    %c0_i32_1 = arith.constant 0 : i32
    return %c0_i32, %c0_i32_0 : i32, i32
  }
  func.func @transform_4(%arg0: i32) -> (i32, i32) {
    %c0_i32 = arith.constant 0 : i32
    %c0_i32_0 = arith.constant 0 : i32
    %c0_i32_1 = arith.constant 0 : i32
    return %c0_i32, %c0_i32_0 : i32, i32
  }
  func.func @transform_5(%arg0: i32) -> (i32, i32) {
    %c0_i32 = arith.constant 0 : i32
    %c0_i32_0 = arith.constant 0 : i32
    %c0_i32_1 = arith.constant 0 : i32
    return %c0_i32, %c0_i32_0 : i32, i32
  }
  func.func @transform_6(%arg0: i32) -> (i32, i32) {
    %c0_i32 = arith.constant 0 : i32
    %c0_i32_0 = arith.constant 0 : i32
    %c0_i32_1 = arith.constant 0 : i32
    return %c0_i32, %c0_i32_0 : i32, i32
  }
  func.func @transform_7(%arg0: i32) -> (i32, i32) {
    %c0_i32 = arith.constant 0 : i32
    %c0_i32_0 = arith.constant 0 : i32
    %c0_i32_1 = arith.constant 0 : i32
    return %c0_i32, %c0_i32_0 : i32, i32
  }
  func.func @transform_8(%arg0: i32) -> (i32, i32) {
    %c0_i32 = arith.constant 0 : i32
    %c0_i32_0 = arith.constant 0 : i32
    %c0_i32_1 = arith.constant 0 : i32
    return %c0_i32, %c0_i32_0 : i32, i32
  }
  func.func @transform_9(%arg0: i32) -> (i32, i32) {
    %c0_i32 = arith.constant 0 : i32
    %c0_i32_0 = arith.constant 0 : i32
    %c0_i32_1 = arith.constant 0 : i32
    return %c0_i32, %c0_i32_0 : i32, i32
  }
  func.func @transform_10(%arg0: i32) -> (i32, i32) {
    %c0_i32 = arith.constant 0 : i32
    %c0_i32_0 = arith.constant 0 : i32
    %c0_i32_1 = arith.constant 0 : i32
    return %c0_i32, %c0_i32_0 : i32, i32
  }
  func.func @transform_11(%arg0: i32) -> (i32, i32) {
    %c0_i32 = arith.constant 0 : i32
    %c0_i32_0 = arith.constant 0 : i32
    %c0_i32_1 = arith.constant 0 : i32
    return %c0_i32, %c0_i32_0 : i32, i32
  }
  func.func @transform_12(%arg0: i32) -> (i32, i32) {
    %c0_i32 = arith.constant 0 : i32
    %c0_i32_0 = arith.constant 0 : i32
    %c0_i32_1 = arith.constant 0 : i32
    return %c0_i32, %c0_i32_0 : i32, i32
  }
  func.func @transform_13(%arg0: i32) -> (i32, i32) {
    %c0_i32 = arith.constant 0 : i32
    %c0_i32_0 = arith.constant 0 : i32
    %c0_i32_1 = arith.constant 0 : i32
    return %c0_i32, %c0_i32_0 : i32, i32
  }
  func.func @transform_14(%arg0: i32) -> (i32, i32) {
    %c0_i32 = arith.constant 0 : i32
    %c0_i32_0 = arith.constant 0 : i32
    %c0_i32_1 = arith.constant 0 : i32
    return %c0_i32, %c0_i32_0 : i32, i32
  }
  func.func @transform_15(%arg0: i32) -> (i32, i32) {
    %c0_i32 = arith.constant 0 : i32
    %c0_i32_0 = arith.constant 0 : i32
    %c0_i32_1 = arith.constant 0 : i32
    return %c0_i32, %c0_i32_0 : i32, i32
  }
  func.func @transform_16(%arg0: i32) -> (i32, i32) {
    %c0_i32 = arith.constant 0 : i32
    %c0_i32_0 = arith.constant 0 : i32
    %c0_i32_1 = arith.constant 0 : i32
    return %c0_i32, %c0_i32_0 : i32, i32
  }
  func.func @transform_17(%arg0: i32) -> (i32, i32) {
    %c0_i32 = arith.constant 0 : i32
    %c0_i32_0 = arith.constant 0 : i32
    %c0_i32_1 = arith.constant 0 : i32
    return %c0_i32, %c0_i32_0 : i32, i32
  }
  func.func @transform_18(%arg0: i32) -> (i32, i32) {
    %c0_i32 = arith.constant 0 : i32
    %c0_i32_0 = arith.constant 0 : i32
    %c0_i32_1 = arith.constant 0 : i32
    return %c0_i32, %c0_i32_0 : i32, i32
  }
  func.func @transform_19(%arg0: i32) -> (i32, i32) {
    %c0_i32 = arith.constant 0 : i32
    %c0_i32_0 = arith.constant 0 : i32
    return %arg0, %c0_i32 : i32, i32
  }
}

</mosaic_0001>

<llo_original>
// kernel: _lambda_.1
$region0: #{_lambda_.1}
  #allocation0 [shape = 'u32[]', space=smem, size = 0x4, offset = 0x4, fixed_abs, tag = 'smem constant byte address 0x4 - core index']
  #allocation1 [shape = 'u32[72,128]{1,0:T(1,128)}', space=vmem, size = 0x9000, scoped, tag = 'internal scratch']
  %s0 = inlined_call_operand.vmem [shape: f32[8,128], index: 0, kind: input, shape index: {}]
  %s1 = inlined_call_operand.hbm [shape: f32[128,96], index: 1, kind: input, shape index: {}]
  %s2 = inlined_call_operand.vmem [shape: f32[1,96], index: 2, kind: input, shape index: {}]
  %s3 = inlined_call_operand.hbm [shape: f32[96,96], index: 3, kind: input, shape index: {}]
  %s4 = inlined_call_operand.vmem [shape: f32[1,96], index: 4, kind: input, shape index: {}]
  %s5 = inlined_call_operand.hbm [shape: f32[96,96], index: 5, kind: input, shape index: {}]
  %s6 = inlined_call_operand.vmem [shape: f32[1,96], index: 6, kind: input, shape index: {}]
  %s7 = inlined_call_operand.hbm [shape: f32[96,96], index: 7, kind: input, shape index: {}]
  %s8 = inlined_call_operand.vmem [shape: f32[1,96], index: 8, kind: input, shape index: {}]
  %s9 = inlined_call_operand.hbm [shape: f32[96,96], index: 9, kind: input, shape index: {}]
  %s10 = inlined_call_operand.vmem [shape: f32[1,96], index: 10, kind: input, shape index: {}]
  %s11 = inlined_call_operand.hbm [shape: f32[96,128], index: 11, kind: input, shape index: {}]
  %s12 = inlined_call_operand.vmem [shape: f32[1,128], index: 12, kind: input, shape index: {}]
  %s13 = inlined_call_operand.hbm [shape: f32[128,128], index: 13, kind: input, shape index: {}]
  %s14 = inlined_call_operand.vmem [shape: f32[1,128], index: 14, kind: input, shape index: {}]
  %s15 = inlined_call_operand.hbm [shape: f32[128,128], index: 15, kind: input, shape index: {}]
  %s16 = inlined_call_operand.vmem [shape: f32[1,128], index: 16, kind: input, shape index: {}]
  %s17 = inlined_call_operand.vmem [shape: f32[128,128], index: 17, kind: input, shape index: {}]
  %s18 = inlined_call_operand.vmem [shape: f32[1,128], index: 18, kind: input, shape index: {}]
  %s19 = inlined_call_operand.vmem [shape: f32[8,128], index: 19, kind: output, shape index: {}]
  %s20 = sld [smem:[#allocation0]]
  $region118: #{_lambda_.1} parent=0
    _
  %s22 = ssub.s32 1, %s20
  %s23 = scalar_select 0, %s22, %s20
  $region1: #{_lambda_.1} parent=0
    #allocation2 [shape = 'u8[65536]{0}', space=vmem, size = 0x10000, scoped, tag = 'input window, operand 1, single buffered']
    #allocation3 [shape = 's32[1]{0}', space=sflag, size = 0x4, scoped, tag = 'scoped memory for _lambda_.1']
    #allocation4 [shape = 'u8[49152]{0}', space=vmem, size = 0xc000, scoped, tag = 'input window, operand 3, single buffered']
    #allocation5 [shape = 's32[1]{0}', space=sflag, size = 0x4, scoped, tag = 'scoped memory for _lambda_.1']
    #allocation6 [shape = 'u8[49152]{0}', space=vmem, size = 0xc000, scoped, tag = 'input window, operand 5, single buffered']
    #allocation7 [shape = 'u8[49152]{0}', space=vmem, size = 0xc000, scoped, tag = 'input window, operand 7, single buffered']
    #allocation8 [shape = 's32[1]{0}', space=sflag, size = 0x4, scoped, tag = 'scoped memory for _lambda_.1']
    #allocation9 [shape = 'u8[49152]{0}', space=vmem, size = 0xc000, scoped, tag = 'input window, operand 9, single buffered']
    #allocation10 [shape = 'u8[49152]{0}', space=vmem, size = 0xc000, scoped, tag = 'input window, operand 11, single buffered']
    #allocation11 [shape = 's32[1]{0}', space=sflag, size = 0x4, scoped, tag = 'scoped memory for _lambda_.1']
    #allocation12 [shape = 'u8[65536]{0}', space=vmem, size = 0x10000, scoped, tag = 'input window, operand 13, single buffered']
    #allocation13 [shape = 'u8[65536]{0}', space=vmem, size = 0x10000, scoped, tag = 'input window, operand 15, single buffered']
    #allocation14 [shape = 's32[1]{0}', space=sflag, size = 0x4, scoped, tag = 'scoped memory for _lambda_.1']
    %24 = vsyncpa [#allocation3], 0
    %25 = vsyncpa [#allocation5], 0
    %26 = vsyncpa [#allocation8], 0
    %27 = vsyncpa [#allocation11], 0
    %28 = vsyncpa [#allocation14], 0
    // Predicated region
    $region2: #{_lambda_.1} parent=1 // pred_check
      _
    $region3: #{_lambda_.1} parent=1 // pred_check_branch
      %30 = sbr.rel (0) target = $region5
    $region4: #{_lambda_.1} parent=1 // pred_region
      _
    $region5: #{_lambda_.1} parent=1 // pred_fallthru
      _
    // Predicated region
    $region6: #{_lambda_.1} parent=1 // pred_check
      _
    $region7: #{_lambda_.1} parent=1 // pred_check_branch
      %32 = sbr.rel (0) target = $region9
    $region8: #{_lambda_.1} parent=1 // pred_region
      %34 = vsyncadd [#allocation3], 0
      %s35 = sshll.u32 %s1, 4
      %s36 = int_to_ptr.hbm [resolvable:$true] %s35
      %s37 = sshll.u32 [#allocation2], 4
      %s38 = int_to_ptr.vmem [resolvable:$true] %s37
      %43 = dma.hbm_to_vmem [thread:$0]  %s36, 2048, %s38, [#allocation3], 128, 128, 8
    $region9: #{_lambda_.1} parent=1 // pred_fallthru
      _
    // Predicated region
    $region10: #{_lambda_.1} parent=1 // pred_check
      _
    $region11: #{_lambda_.1} parent=1 // pred_check_branch
      %45 = sbr.rel (0) target = $region13
    $region12: #{_lambda_.1} parent=1 // pred_region
      _
    $region13: #{_lambda_.1} parent=1 // pred_fallthru
      _
    // Predicated region
    $region14: #{_lambda_.1} parent=1 // pred_check
      _
    $region15: #{_lambda_.1} parent=1 // pred_check_branch
      %47 = sbr.rel (0) target = $region17
    $region16: #{_lambda_.1} parent=1 // pred_region
      %49 = vsyncadd [#allocation5], 0
      %s50 = sshll.u32 %s3, 4
      %s51 = int_to_ptr.hbm [resolvable:$true] %s50
      %s52 = sshll.u32 [#allocation4], 4
      %s53 = int_to_ptr.vmem [resolvable:$true] %s52
      %58 = dma.hbm_to_vmem [thread:$0]  %s51, 1536, %s53, [#allocation5], 128, 128, 8
    $region17: #{_lambda_.1} parent=1 // pred_fallthru
      _
    // Predicated region
    $region18: #{_lambda_.1} parent=1 // pred_check
      _
    $region19: #{_lambda_.1} parent=1 // pred_check_branch
      %60 = sbr.rel (0) target = $region21
    $region20: #{_lambda_.1} parent=1 // pred_region
      _
    $region21: #{_lambda_.1} parent=1 // pred_fallthru
      _
    // Predicated region
    $region22: #{_lambda_.1} parent=1 // pred_check
      _
    $region23: #{_lambda_.1} parent=1 // pred_check_branch
      %62 = sbr.rel (0) target = $region25
    $region24: #{_lambda_.1} parent=1 // pred_region
      %64 = vsyncadd [#allocation5], 0
      %s65 = sshll.u32 %s5, 4
      %s66 = int_to_ptr.hbm [resolvable:$true] %s65
      %s67 = sshll.u32 [#allocation6], 4
      %s68 = int_to_ptr.vmem [resolvable:$true] %s67
      %73 = dma.hbm_to_vmem [thread:$0]  %s66, 1536, %s68, [#allocation5], 128, 128, 8
    $region25: #{_lambda_.1} parent=1 // pred_fallthru
      _
    // Predicated region
    $region26: #{_lambda_.1} parent=1 // pred_check
      _
    $region27: #{_lambda_.1} parent=1 // pred_check_branch
      %75 = sbr.rel (0) target = $region29
    $region28: #{_lambda_.1} parent=1 // pred_region
      _
    $region29: #{_lambda_.1} parent=1 // pred_fallthru
      _
    // Predicated region
    $region30: #{_lambda_.1} parent=1 // pred_check
      _
    $region31: #{_lambda_.1} parent=1 // pred_check_branch
      %77 = sbr.rel (0) target = $region33
    $region32: #{_lambda_.1} parent=1 // pred_region
      %79 = vsyncadd [#allocation8], 0
      %s80 = sshll.u32 %s7, 4
      %s81 = int_to_ptr.hbm [resolvable:$true] %s80
      %s82 = sshll.u32 [#allocation7], 4
      %s83 = int_to_ptr.vmem [resolvable:$true] %s82
      %88 = dma.hbm_to_vmem [thread:$0]  %s81, 1536, %s83, [#allocation8], 128, 128, 8
    $region33: #{_lambda_.1} parent=1 // pred_fallthru
      _
    // Predicated region
    $region34: #{_lambda_.1} parent=1 // pred_check
      _
    $region35: #{_lambda_.1} parent=1 // pred_check_branch
      %90 = sbr.rel (0) target = $region37
    $region36: #{_lambda_.1} parent=1 // pred_region
      _
    $region37: #{_lambda_.1} parent=1 // pred_fallthru
      _
    // Predicated region
    $region38: #{_lambda_.1} parent=1 // pred_check
      _
    $region39: #{_lambda_.1} parent=1 // pred_check_branch
      %92 = sbr.rel (0) target = $region41
    $region40: #{_lambda_.1} parent=1 // pred_region
      %94 = vsyncadd [#allocation8], 0
      %s95 = sshll.u32 %s9, 4
      %s96 = int_to_ptr.hbm [resolvable:$true] %s95
      %s97 = sshll.u32 [#allocation9], 4
      %s98 = int_to_ptr.vmem [resolvable:$true] %s97
      %103 = dma.hbm_to_vmem [thread:$0]  %s96, 1536, %s98, [#allocation8], 128, 128, 8
    $region41: #{_lambda_.1} parent=1 // pred_fallthru
      _
    // Predicated region
    $region42: #{_lambda_.1} parent=1 // pred_check
      _
    $region43: #{_lambda_.1} parent=1 // pred_check_branch
      %105 = sbr.rel (0) target = $region45
    $region44: #{_lambda_.1} parent=1 // pred_region
      _
    $region45: #{_lambda_.1} parent=1 // pred_fallthru
      _
    // Predicated region
    $region46: #{_lambda_.1} parent=1 // pred_check
      _
    $region47: #{_lambda_.1} parent=1 // pred_check_branch
      %107 = sbr.rel (0) target = $region49
    $region48: #{_lambda_.1} parent=1 // pred_region
      %109 = vsyncadd [#allocation11], 0
      %s110 = sshll.u32 %s11, 4
      %s111 = int_to_ptr.hbm [resolvable:$true] %s110
      %s112 = sshll.u32 [#allocation10], 4
      %s113 = int_to_ptr.vmem [resolvable:$true] %s112
      %118 = dma.hbm_to_vmem [thread:$0]  %s111, 1536, %s113, [#allocation11], 128, 128, 8
    $region49: #{_lambda_.1} parent=1 // pred_fallthru
      _
    // Predicated region
    $region50: #{_lambda_.1} parent=1 // pred_check
      _
    $region51: #{_lambda_.1} parent=1 // pred_check_branch
      %120 = sbr.rel (0) target = $region53
    $region52: #{_lambda_.1} parent=1 // pred_region
      _
    $region53: #{_lambda_.1} parent=1 // pred_fallthru
      _
    // Predicated region
    $region54: #{_lambda_.1} parent=1 // pred_check
      _
    $region55: #{_lambda_.1} parent=1 // pred_check_branch
      %122 = sbr.rel (0) target = $region57
    $region56: #{_lambda_.1} parent=1 // pred_region
      %124 = vsyncadd [#allocation11], 0
      %s125 = sshll.u32 %s13, 4
      %s126 = int_to_ptr.hbm [resolvable:$true] %s125
      %s127 = sshll.u32 [#allocation12], 4
      %s128 = int_to_ptr.vmem [resolvable:$true] %s127
      %133 = dma.hbm_to_vmem [thread:$0]  %s126, 2048, %s128, [#allocation11], 128, 128, 8
    $region57: #{_lambda_.1} parent=1 // pred_fallthru
      _
    // Predicated region
    $region58: #{_lambda_.1} parent=1 // pred_check
      _
    $region59: #{_lambda_.1} parent=1 // pred_check_branch
      %135 = sbr.rel (0) target = $region61
    $region60: #{_lambda_.1} parent=1 // pred_region
      _
    $region61: #{_lambda_.1} parent=1 // pred_fallthru
      _
    // Predicated region
    $region62: #{_lambda_.1} parent=1 // pred_check
      _
    $region63: #{_lambda_.1} parent=1 // pred_check_branch
      %137 = sbr.rel (0) target = $region65
    $region64: #{_lambda_.1} parent=1 // pred_region
      %139 = vsyncadd [#allocation14], 0
      %s140 = sshll.u32 %s15, 4
      %s141 = int_to_ptr.hbm [resolvable:$true] %s140
      %s142 = sshll.u32 [#allocation13], 4
      %s143 = int_to_ptr.vmem [resolvable:$true] %s142
      %148 = dma.hbm_to_vmem [thread:$0]  %s141, 2048, %s143, [#allocation14], 128, 128, 8
    $region65: #{_lambda_.1} parent=1 // pred_fallthru
      _
    // Predicated region
    $region66: #{_lambda_.1} parent=1 // pred_check
      _
    $region67: #{_lambda_.1} parent=1 // pred_check_branch
      %150 = sbr.rel (0) target = $region69
    $region68: #{_lambda_.1} parent=1 // pred_region
      _
    $region69: #{_lambda_.1} parent=1 // pred_fallthru
      _
    // Predicated region
    $region70: #{_lambda_.1} parent=1 // pred_check
      _
    $region71: #{_lambda_.1} parent=1 // pred_check_branch
      %152 = sbr.rel (0) target = $region73
    $region72: #{_lambda_.1} parent=1 // pred_region
      _
    $region73: #{_lambda_.1} parent=1 // pred_fallthru
      _
    // Predicated region
    $region74: #{_lambda_.1} parent=1 // pred_check
      _
    $region75: #{_lambda_.1} parent=1 // pred_check_branch
      %154 = sbr.rel (0) target = $region77
    $region76: #{_lambda_.1} parent=1 // pred_region
      _
    $region77: #{_lambda_.1} parent=1 // pred_fallthru
      _
    // Predicated region
    $region78: #{_lambda_.1} parent=1 // pred_check
      _
    $region79: #{_lambda_.1} parent=1 // pred_check_branch
      %156 = sbr.rel (0) target = $region81
    $region80: #{_lambda_.1} parent=1 // pred_region
      %158 = dma.done [#allocation3], 2048
    $region81: #{_lambda_.1} parent=1 // pred_fallthru
      _
    // Predicated region
    $region82: #{_lambda_.1} parent=1 // pred_check
      _
    $region83: #{_lambda_.1} parent=1 // pred_check_branch
      %160 = sbr.rel (0) target = $region85
    $region84: #{_lambda_.1} parent=1 // pred_region
      %162 = dma.done [#allocation5], 1536
    $region85: #{_lambda_.1} parent=1 // pred_fallthru
      _
    // Predicated region
    $region86: #{_lambda_.1} parent=1 // pred_check
      _
    $region87: #{_lambda_.1} parent=1 // pred_check_branch
      %164 = sbr.rel (0) target = $region89
    $region88: #{_lambda_.1} parent=1 // pred_region
      %166 = dma.done [#allocation5], 1536
    $region89: #{_lambda_.1} parent=1 // pred_fallthru
      _
    // Predicated region
    $region90: #{_lambda_.1} parent=1 // pred_check
      _
    $region91: #{_lambda_.1} parent=1 // pred_check_branch
      %168 = sbr.rel (0) target = $region93
    $region92: #{_lambda_.1} parent=1 // pred_region
      %170 = dma.done [#allocation8], 1536
    $region93: #{_lambda_.1} parent=1 // pred_fallthru
      _
    // Predicated region
    $region94: #{_lambda_.1} parent=1 // pred_check
      _
    $region95: #{_lambda_.1} parent=1 // pred_check_branch
      %172 = sbr.rel (0) target = $region97
    $region96: #{_lambda_.1} parent=1 // pred_region
      %174 = dma.done [#allocation8], 1536
    $region97: #{_lambda_.1} parent=1 // pred_fallthru
      _
    // Predicated region
    $region98: #{_lambda_.1} parent=1 // pred_check
      _
    $region99: #{_lambda_.1} parent=1 // pred_check_branch
      %176 = sbr.rel (0) target = $region101
    $region100: #{_lambda_.1} parent=1 // pred_region
      %178 = dma.done [#allocation11], 1536
    $region101: #{_lambda_.1} parent=1 // pred_fallthru
      _
    // Predicated region
    $region102: #{_lambda_.1} parent=1 // pred_check
      _
    $region103: #{_lambda_.1} parent=1 // pred_check_branch
      %180 = sbr.rel (0) target = $region105
    $region104: #{_lambda_.1} parent=1 // pred_region
      %182 = dma.done [#allocation11], 2048
    $region105: #{_lambda_.1} parent=1 // pred_fallthru
      _
    // Predicated region
    $region106: #{_lambda_.1} parent=1 // pred_check
      _
    $region107: #{_lambda_.1} parent=1 // pred_check_branch
      %184 = sbr.rel (0) target = $region109
    $region108: #{_lambda_.1} parent=1 // pred_region
      %186 = dma.done [#allocation14], 2048
    $region109: #{_lambda_.1} parent=1 // pred_fallthru
      _
    %v187 = vld [vmem:[%s0] sm:$0xff]
    %v188 = vld [vmem:[#allocation2] sm:$0xff]
    %v189 = vld [vmem:[#allocation2 + $0x8] sm:$0xff]
    %v190 = vld [vmem:[#allocation2 + $0x10] sm:$0xff]
    %v191 = vld [vmem:[#allocation2 + $0x18] sm:$0xff]
    %v192 = vld [vmem:[#allocation2 + $0x20] sm:$0xff]
    %v193 = vld [vmem:[#allocation2 + $0x28] sm:$0xff]
    %v194 = vld [vmem:[#allocation2 + $0x30] sm:$0xff]
    %v195 = vld [vmem:[#allocation2 + $0x38] sm:$0xff]
    %v196 = vld [vmem:[#allocation2 + $0x40] sm:$0xff]
    %v197 = vld [vmem:[#allocation2 + $0x48] sm:$0xff]
    %v198 = vld [vmem:[#allocation2 + $0x50] sm:$0xff]
    %v199 = vld [vmem:[#allocation2 + $0x58] sm:$0xff]
    %v200 = vld [vmem:[#allocation2 + $0x60] sm:$0xff]
    %v201 = vld [vmem:[#allocation2 + $0x68] sm:$0xff]
    %v202 = vld [vmem:[#allocation2 + $0x70] sm:$0xff]
    %v203 = vld [vmem:[#allocation2 + $0x78] sm:$0xff]
    %v204 = vld [vmem:[%s2] sm:$0x1]
    %v206 = vperm.slane %v204, 0
    %208 = vmatpush.msra.mxu0 %v203
    %209 = vmatpush.msra.mxu0 %v202
    %210 = vmatpush.msra.mxu0 %v201
    %211 = vmatpush.msra.mxu0 %v200
    %212 = vmatpush.msra.mxu0 %v199
    %213 = vmatpush.msra.mxu0 %v198
    %214 = vmatpush.msra.mxu0 %v197
    %215 = vmatpush.msra.mxu0 %v196
    %216 = vmatpush.msra.mxu0 %v195
    %217 = vmatpush.msra.mxu0 %v194
    %218 = vmatpush.msra.mxu0 %v193
    %219 = vmatpush.msra.mxu0 %v192
    %220 = vmatpush.msra.mxu0 %v191
    %221 = vmatpush.msra.mxu0 %v190
    %222 = vmatpush.msra.mxu0 %v189
    %223 = vmatpush.msra.mxu0 %v188
    %224 = vmatmul.f32.gmra.mxu0 %v187
    %v225 = vpop.f32.mrf.mxu0
    %v226 = vadd.f32 %v206, %v225
    %227 = vdwg.mxu0
    %vm228 = vcmp.gt.f32.partialorder %v226, 0.0
    %v229 = vmul.f32 %v226, 0.01
    %v230 = vsel %vm228, %v226, %v229
    %v231 = vld [vmem:[#allocation4] sm:$0xff]
    %v232 = vld [vmem:[#allocation4 + $0x8] sm:$0xff]
    %v233 = vld [vmem:[#allocation4 + $0x10] sm:$0xff]
    %v234 = vld [vmem:[#allocation4 + $0x18] sm:$0xff]
    %v235 = vld [vmem:[#allocation4 + $0x20] sm:$0xff]
    %v236 = vld [vmem:[#allocation4 + $0x28] sm:$0xff]
    %v237 = vld [vmem:[#allocation4 + $0x30] sm:$0xff]
    %v238 = vld [vmem:[#allocation4 + $0x38] sm:$0xff]
    %v239 = vld [vmem:[#allocation4 + $0x40] sm:$0xff]
    %v240 = vld [vmem:[#allocation4 + $0x48] sm:$0xff]
    %v241 = vld [vmem:[#allocation4 + $0x50] sm:$0xff]
    %v242 = vld [vmem:[#allocation4 + $0x58] sm:$0xff]
    %v243 = vld [vmem:[%s4] sm:$0x1]
    %v245 = vperm.slane %v243, 0
    %vm247 = vcmask 785408
    %v249 = vsel %vm247, %v230, 0
    %251 = vmatpush.msra.mxu0 0.0
    %252 = vmatpush.msra.mxu0 0.0
    %253 = vmatpush.msra.mxu0 0.0
    %254 = vmatpush.msra.mxu0 0.0
    %255 = vmatpush.msra.mxu0 %v242
    %256 = vmatpush.msra.mxu0 %v241
    %257 = vmatpush.msra.mxu0 %v240
    %258 = vmatpush.msra.mxu0 %v239
    %259 = vmatpush.msra.mxu0 %v238
    %260 = vmatpush.msra.mxu0 %v237
    %261 = vmatpush.msra.mxu0 %v236
    %262 = vmatpush.msra.mxu0 %v235
    %263 = vmatpush.msra.mxu0 %v234
    %264 = vmatpush.msra.mxu0 %v233
    %265 = vmatpush.msra.mxu0 %v232
    %266 = vmatpush.msra.mxu0 %v231
    %267 = vmatmul.f32.gmra.mxu0 %v249
    %v268 = vpop.f32.mrf.mxu0
    %v269 = vadd.f32 %v245, %v268
    %270 = vdwg.mxu0
    %vm271 = vcmp.gt.f32.partialorder %v269, 0.0
    %v272 = vmul.f32 %v269, 0.01
    %v273 = vsel %vm271, %v269, %v272
    %v274 = vadd.f32 %v230, %v273
    %v275 = vld [vmem:[#allocation6] sm:$0xff]
    %v276 = vld [vmem:[#allocation6 + $0x8] sm:$0xff]
    %v277 = vld [vmem:[#allocation6 + $0x10] sm:$0xff]
    %v278 = vld [vmem:[#allocation6 + $0x18] sm:$0xff]
    %v279 = vld [vmem:[#allocation6 + $0x20] sm:$0xff]
    %v280 = vld [vmem:[#allocation6 + $0x28] sm:$0xff]
    %v281 = vld [vmem:[#allocation6 + $0x30] sm:$0xff]
    %v282 = vld [vmem:[#allocation6 + $0x38] sm:$0xff]
    %v283 = vld [vmem:[#allocation6 + $0x40] sm:$0xff]
    %v284 = vld [vmem:[#allocation6 + $0x48] sm:$0xff]
    %v285 = vld [vmem:[#allocation6 + $0x50] sm:$0xff]
    %v286 = vld [vmem:[#allocation6 + $0x58] sm:$0xff]
    %v287 = vld [vmem:[%s6] sm:$0x1]
    %v289 = vperm.slane %v287, 0
    %v292 = vsel %vm247, %v274, 0
    %294 = vmatpush.msra.mxu0 0.0
    %295 = vmatpush.msra.mxu0 0.0
    %296 = vmatpush.msra.mxu0 0.0
    %297 = vmatpush.msra.mxu0 0.0
    %298 = vmatpush.msra.mxu0 %v286
    %299 = vmatpush.msra.mxu0 %v285
    %300 = vmatpush.msra.mxu0 %v284
    %301 = vmatpush.msra.mxu0 %v283
    %302 = vmatpush.msra.mxu0 %v282
    %303 = vmatpush.msra.mxu0 %v281
    %304 = vmatpush.msra.mxu0 %v280
    %305 = vmatpush.msra.mxu0 %v279
    %306 = vmatpush.msra.mxu0 %v278
    %307 = vmatpush.msra.mxu0 %v277
    %308 = vmatpush.msra.mxu0 %v276
    %309 = vmatpush.msra.mxu0 %v275
    %310 = vmatmul.f32.gmra.mxu0 %v292
    %v311 = vpop.f32.mrf.mxu0
    %v312 = vadd.f32 %v289, %v311
    %313 = vdwg.mxu0
    %vm314 = vcmp.gt.f32.partialorder %v312, 0.0
    %v315 = vmul.f32 %v312, 0.01
    %v316 = vsel %vm314, %v312, %v315
    %v317 = vadd.f32 %v274, %v316
    %v318 = vld [vmem:[#allocation7] sm:$0xff]
    %v319 = vld [vmem:[#allocation7 + $0x8] sm:$0xff]
    %v320 = vld [vmem:[#allocation7 + $0x10] sm:$0xff]
    %v321 = vld [vmem:[#allocation7 + $0x18] sm:$0xff]
    %v322 = vld [vmem:[#allocation7 + $0x20] sm:$0xff]
    %v323 = vld [vmem:[#allocation7 + $0x28] sm:$0xff]
    %v324 = vld [vmem:[#allocation7 + $0x30] sm:$0xff]
    %v325 = vld [vmem:[#allocation7 + $0x38] sm:$0xff]
    %v326 = vld [vmem:[#allocation7 + $0x40] sm:$0xff]
    %v327 = vld [vmem:[#allocation7 + $0x48] sm:$0xff]
    %v328 = vld [vmem:[#allocation7 + $0x50] sm:$0xff]
    %v329 = vld [vmem:[#allocation7 + $0x58] sm:$0xff]
    %v330 = vld [vmem:[%s8] sm:$0x1]
    %v332 = vperm.slane %v330, 0
    %v335 = vsel %vm247, %v317, 0
    %337 = vmatpush.msra.mxu0 0.0
    %338 = vmatpush.msra.mxu0 0.0
    %339 = vmatpush.msra.mxu0 0.0
    %340 = vmatpush.msra.mxu0 0.0
    %341 = vmatpush.msra.mxu0 %v329
    %342 = vmatpush.msra.mxu0 %v328
    %343 = vmatpush.msra.mxu0 %v327
    %344 = vmatpush.msra.mxu0 %v326
    %345 = vmatpush.msra.mxu0 %v325
    %346 = vmatpush.msra.mxu0 %v324
    %347 = vmatpush.msra.mxu0 %v323
    %348 = vmatpush.msra.mxu0 %v322
    %349 = vmatpush.msra.mxu0 %v321
    %350 = vmatpush.msra.mxu0 %v320
    %351 = vmatpush.msra.mxu0 %v319
    %352 = vmatpush.msra.mxu0 %v318
    %353 = vmatmul.f32.gmra.mxu0 %v335
    %v354 = vpop.f32.mrf.mxu0
    %v355 = vadd.f32 %v332, %v354
    %356 = vdwg.mxu0
    %vm357 = vcmp.gt.f32.partialorder %v355, 0.0
    %v358 = vmul.f32 %v355, 0.01
    %v359 = vsel %vm357, %v355, %v358
    %v360 = vadd.f32 %v317, %v359
    %v361 = vld [vmem:[#allocation9] sm:$0xff]
    %v362 = vld [vmem:[#allocation9 + $0x8] sm:$0xff]
    %v363 = vld [vmem:[#allocation9 + $0x10] sm:$0xff]
    %v364 = vld [vmem:[#allocation9 + $0x18] sm:$0xff]
    %v365 = vld [vmem:[#allocation9 + $0x20] sm:$0xff]
    %v366 = vld [vmem:[#allocation9 + $0x28] sm:$0xff]
    %v367 = vld [vmem:[#allocation9 + $0x30] sm:$0xff]
    %v368 = vld [vmem:[#allocation9 + $0x38] sm:$0xff]
    %v369 = vld [vmem:[#allocation9 + $0x40] sm:$0xff]
    %v370 = vld [vmem:[#allocation9 + $0x48] sm:$0xff]
    %v371 = vld [vmem:[#allocation9 + $0x50] sm:$0xff]
    %v372 = vld [vmem:[#allocation9 + $0x58] sm:$0xff]
    %v373 = vld [vmem:[%s10] sm:$0x1]
    %v375 = vperm.slane %v373, 0
    %v378 = vsel %vm247, %v360, 0
    %380 = vmatpush.msra.mxu0 0.0
    %381 = vmatpush.msra.mxu0 0.0
    %382 = vmatpush.msra.mxu0 0.0
    %383 = vmatpush.msra.mxu0 0.0
    %384 = vmatpush.msra.mxu0 %v372
    %385 = vmatpush.msra.mxu0 %v371
    %386 = vmatpush.msra.mxu0 %v370
    %387 = vmatpush.msra.mxu0 %v369
    %388 = vmatpush.msra.mxu0 %v368
    %389 = vmatpush.msra.mxu0 %v367
    %390 = vmatpush.msra.mxu0 %v366
    %391 = vmatpush.msra.mxu0 %v365
    %392 = vmatpush.msra.mxu0 %v364
    %393 = vmatpush.msra.mxu0 %v363
    %394 = vmatpush.msra.mxu0 %v362
    %395 = vmatpush.msra.mxu0 %v361
    %396 = vmatmul.f32.gmra.mxu0 %v378
    %v397 = vpop.f32.mrf.mxu0
    %v398 = vadd.f32 %v375, %v397
    %399 = vdwg.mxu0
    %v400 = vld [vmem:[#allocation10] sm:$0xff]
    %v401 = vld [vmem:[#allocation10 + $0x8] sm:$0xff]
    %v402 = vld [vmem:[#allocation10 + $0x10] sm:$0xff]
    %v403 = vld [vmem:[#allocation10 + $0x18] sm:$0xff]
    %v404 = vld [vmem:[#allocation10 + $0x20] sm:$0xff]
    %v405 = vld [vmem:[#allocation10 + $0x28] sm:$0xff]
    %v406 = vld [vmem:[#allocation10 + $0x30] sm:$0xff]
    %v407 = vld [vmem:[#allocation10 + $0x38] sm:$0xff]
    %v408 = vld [vmem:[#allocation10 + $0x40] sm:$0xff]
    %v409 = vld [vmem:[#allocation10 + $0x48] sm:$0xff]
    %v410 = vld [vmem:[#allocation10 + $0x50] sm:$0xff]
    %v411 = vld [vmem:[#allocation10 + $0x58] sm:$0xff]
    %v412 = vld [vmem:[%s12] sm:$0x1]
    %v414 = vperm.slane %v412, 0
    %v417 = vsel %vm247, %v398, 0
    %419 = vmatpush.msra.mxu0 0.0
    %420 = vmatpush.msra.mxu0 0.0
    %421 = vmatpush.msra.mxu0 0.0
    %422 = vmatpush.msra.mxu0 0.0
    %423 = vmatpush.msra.mxu0 %v411
    %424 = vmatpush.msra.mxu0 %v410
    %425 = vmatpush.msra.mxu0 %v409
    %426 = vmatpush.msra.mxu0 %v408
    %427 = vmatpush.msra.mxu0 %v407
    %428 = vmatpush.msra.mxu0 %v406
    %429 = vmatpush.msra.mxu0 %v405
    %430 = vmatpush.msra.mxu0 %v404
    %431 = vmatpush.msra.mxu0 %v403
    %432 = vmatpush.msra.mxu0 %v402
    %433 = vmatpush.msra.mxu0 %v401
    %434 = vmatpush.msra.mxu0 %v400
    %435 = vmatmul.f32.gmra.mxu0 %v417
    %v436 = vpop.f32.mrf.mxu0
    %v437 = vadd.f32 %v414, %v436
    %438 = vdwg.mxu0
    %vm439 = vcmp.gt.f32.partialorder %v437, 0.0
    %v440 = vmul.f32 %v437, 0.01
    %v441 = vsel %vm439, %v437, %v440
    %v442 = vld [vmem:[#allocation12] sm:$0xff]
    %v443 = vld [vmem:[#allocation12 + $0x8] sm:$0xff]
    %v444 = vld [vmem:[#allocation12 + $0x10] sm:$0xff]
    %v445 = vld [vmem:[#allocation12 + $0x18] sm:$0xff]
    %v446 = vld [vmem:[#allocation12 + $0x20] sm:$0xff]
    %v447 = vld [vmem:[#allocation12 + $0x28] sm:$0xff]
    %v448 = vld [vmem:[#allocation12 + $0x30] sm:$0xff]
    %v449 = vld [vmem:[#allocation12 + $0x38] sm:$0xff]
    %v450 = vld [vmem:[#allocation12 + $0x40] sm:$0xff]
    %v451 = vld [vmem:[#allocation12 + $0x48] sm:$0xff]
    %v452 = vld [vmem:[#allocation12 + $0x50] sm:$0xff]
    %v453 = vld [vmem:[#allocation12 + $0x58] sm:$0xff]
    %v454 = vld [vmem:[#allocation12 + $0x60] sm:$0xff]
    %v455 = vld [vmem:[#allocation12 + $0x68] sm:$0xff]
    %v456 = vld [vmem:[#allocation12 + $0x70] sm:$0xff]
    %v457 = vld [vmem:[#allocation12 + $0x78] sm:$0xff]
    %v458 = vld [vmem:[%s14] sm:$0x1]
    %v460 = vperm.slane %v458, 0
    %462 = vmatpush.msra.mxu0 %v457
    %463 = vmatpush.msra.mxu0 %v456
    %464 = vmatpush.msra.mxu0 %v455
    %465 = vmatpush.msra.mxu0 %v454
    %466 = vmatpush.msra.mxu0 %v453
    %467 = vmatpush.msra.mxu0 %v452
    %468 = vmatpush.msra.mxu0 %v451
    %469 = vmatpush.msra.mxu0 %v450
    %470 = vmatpush.msra.mxu0 %v449
    %471 = vmatpush.msra.mxu0 %v448
    %472 = vmatpush.msra.mxu0 %v447
    %473 = vmatpush.msra.mxu0 %v446
    %474 = vmatpush.msra.mxu0 %v445
    %475 = vmatpush.msra.mxu0 %v444
    %476 = vmatpush.msra.mxu0 %v443
    %477 = vmatpush.msra.mxu0 %v442
    %478 = vmatmul.f32.gmra.mxu0 %v441
    %v479 = vpop.f32.mrf.mxu0
    %v480 = vadd.f32 %v460, %v479
    %481 = vdwg.mxu0
    %vm482 = vcmp.gt.f32.partialorder %v480, 0.0
    %v483 = vmul.f32 %v480, 0.01
    %v484 = vsel %vm482, %v480, %v483
    %v485 = vadd.f32 %v441, %v484
    %v486 = vld [vmem:[#allocation13] sm:$0xff]
    %v487 = vld [vmem:[#allocation13 + $0x8] sm:$0xff]
    %v488 = vld [vmem:[#allocation13 + $0x10] sm:$0xff]
    %v489 = vld [vmem:[#allocation13 + $0x18] sm:$0xff]
    %v490 = vld [vmem:[#allocation13 + $0x20] sm:$0xff]
    %v491 = vld [vmem:[#allocation13 + $0x28] sm:$0xff]
    %v492 = vld [vmem:[#allocation13 + $0x30] sm:$0xff]
    %v493 = vld [vmem:[#allocation13 + $0x38] sm:$0xff]
    %v494 = vld [vmem:[#allocation13 + $0x40] sm:$0xff]
    %v495 = vld [vmem:[#allocation13 + $0x48] sm:$0xff]
    %v496 = vld [vmem:[#allocation13 + $0x50] sm:$0xff]
    %v497 = vld [vmem:[#allocation13 + $0x58] sm:$0xff]
    %v498 = vld [vmem:[#allocation13 + $0x60] sm:$0xff]
    %v499 = vld [vmem:[#allocation13 + $0x68] sm:$0xff]
    %v500 = vld [vmem:[#allocation13 + $0x70] sm:$0xff]
    %v501 = vld [vmem:[#allocation13 + $0x78] sm:$0xff]
    %v502 = vld [vmem:[%s16] sm:$0x1]
    %v504 = vperm.slane %v502, 0
    %506 = vmatpush.msra.mxu0 %v501
    %507 = vmatpush.msra.mxu0 %v500
    %508 = vmatpush.msra.mxu0 %v499
    %509 = vmatpush.msra.mxu0 %v498
    %510 = vmatpush.msra.mxu0 %v497
    %511 = vmatpush.msra.mxu0 %v496
    %512 = vmatpush.msra.mxu0 %v495
    %513 = vmatpush.msra.mxu0 %v494
    %514 = vmatpush.msra.mxu0 %v493
    %515 = vmatpush.msra.mxu0 %v492
    %516 = vmatpush.msra.mxu0 %v491
    %517 = vmatpush.msra.mxu0 %v490
    %518 = vmatpush.msra.mxu0 %v489
    %519 = vmatpush.msra.mxu0 %v488
    %520 = vmatpush.msra.mxu0 %v487
    %521 = vmatpush.msra.mxu0 %v486
    %522 = vmatmul.f32.gmra.mxu0 %v485
    %v523 = vpop.f32.mrf.mxu0
    %v524 = vadd.f32 %v504, %v523
    %525 = vdwg.mxu0
    %vm526 = vcmp.gt.f32.partialorder %v524, 0.0
    %v527 = vmul.f32 %v524, 0.01
    %v528 = vsel %vm526, %v524, %v527
    %v529 = vadd.f32 %v485, %v528
    %v530 = vld [vmem:[%s17] sm:$0xff]
    %v531 = vld [vmem:[%s17 + $0x8] sm:$0xff]
    %v532 = vld [vmem:[%s17 + $0x10] sm:$0xff]
    %v533 = vld [vmem:[%s17 + $0x18] sm:$0xff]
    %v534 = vld [vmem:[%s17 + $0x20] sm:$0xff]
    %v535 = vld [vmem:[%s17 + $0x28] sm:$0xff]
    %v536 = vld [vmem:[%s17 + $0x30] sm:$0xff]
    %v537 = vld [vmem:[%s17 + $0x38] sm:$0xff]
    %v538 = vld [vmem:[%s17 + $0x40] sm:$0xff]
    %v539 = vld [vmem:[%s17 + $0x48] sm:$0xff]
    %v540 = vld [vmem:[%s17 + $0x50] sm:$0xff]
    %v541 = vld [vmem:[%s17 + $0x58] sm:$0xff]
    %v542 = vld [vmem:[%s17 + $0x60] sm:$0xff]
    %v543 = vld [vmem:[%s17 + $0x68] sm:$0xff]
    %v544 = vld [vmem:[%s17 + $0x70] sm:$0xff]
    %v545 = vld [vmem:[%s17 + $0x78] sm:$0xff]
    %v546 = vld [vmem:[%s18] sm:$0x1]
    %v548 = vperm.slane %v546, 0
    %550 = vmatpush.msra.mxu0 %v545
    %551 = vmatpush.msra.mxu0 %v544
    %552 = vmatpush.msra.mxu0 %v543
    %553 = vmatpush.msra.mxu0 %v542
    %554 = vmatpush.msra.mxu0 %v541
    %555 = vmatpush.msra.mxu0 %v540
    %556 = vmatpush.msra.mxu0 %v539
    %557 = vmatpush.msra.mxu0 %v538
    %558 = vmatpush.msra.mxu0 %v537
    %559 = vmatpush.msra.mxu0 %v536
    %560 = vmatpush.msra.mxu0 %v535
    %561 = vmatpush.msra.mxu0 %v534
    %562 = vmatpush.msra.mxu0 %v533
    %563 = vmatpush.msra.mxu0 %v532
    %564 = vmatpush.msra.mxu0 %v531
    %565 = vmatpush.msra.mxu0 %v530
    %566 = vmatmul.f32.gmra.mxu0 %v529
    %v567 = vpop.f32.mrf.mxu0
    %v568 = vadd.f32 %v548, %v567
    %569 = vdwg.mxu0
    %570 = vst [vmem:[%s19] sm:$0xff] %v568
    // Predicated region
    $region110: #{_lambda_.1} parent=1 // pred_check
      _
    $region111: #{_lambda_.1} parent=1 // pred_check_branch
      %572 = sbr.rel (0) target = $region113
    $region112: #{_lambda_.1} parent=1 // pred_region
      _
    $region113: #{_lambda_.1} parent=1 // pred_fallthru
      _
    // Predicated region
    $region114: #{_lambda_.1} parent=1 // pred_check
      _
    $region115: #{_lambda_.1} parent=1 // pred_check_branch
      %574 = sbr.rel (0) target = $region117
    $region116: #{_lambda_.1} parent=1 // pred_region
      _
    $region117: #{_lambda_.1} parent=1 // pred_fallthru
      _
    %575 = vsyncpa [#allocation3], 1
    %576 = vsyncpa [#allocation5], 1
    %577 = vsyncpa [#allocation8], 1
    %578 = vsyncpa [#allocation11], 1
    %579 = vsyncpa [#allocation14], 1

</llo_original>
